<compile_context>
chip_gen: v6e
topology: v6e:2x2x1
jax: 0.10.0
libtpu: 0.0.40
codegen_flags: <defaults>
</compile_context>

<pallas_src>
import functools

import jax
import jax.numpy as jnp
from jax.experimental import pallas as pl
from jax.experimental.pallas import tpu as pltpu

LANE = 128  # TPU lane width; weight feature dims are padded to this.


def _toy_mlp_kernel(x_ref, w1_ref, b1_ref, w2_ref, b2_ref, o_ref, xpad_ref, *, in_f):
    # Stage the narrow (TB, in_f) input into a lane-dense, zero-padded
    # (TB, 128) VMEM scratch so both contractions use aligned MXU tiles.
    xpad_ref[...] = jnp.zeros_like(xpad_ref)
    xpad_ref[:, :in_f] = x_ref[...]

    # net1: Linear(10, 10) + ReLU (bias add / max on VPU, hidden under MXU).
    h = jnp.dot(xpad_ref[...], w1_ref[...], preferred_element_type=jnp.float32)
    h = jnp.maximum(h + b1_ref[...], 0.0)
    # net2: Linear(10, 5)
    y = jnp.dot(h, w2_ref[...], preferred_element_type=jnp.float32)
    o_ref[...] = (y + b2_ref[...]).astype(o_ref.dtype)


def _pad_to(a, shape):
    return jnp.pad(a, [(0, s - d) for s, d in zip(shape, a.shape)])


def toy_model_forward(x, w1_t, b1, w2_t, b2, *, block_rows=1024):
    """x: (B, 10); w1_t: (10, 10); b1: (1, 10); w2_t: (10, 5); b2: (1, 5)."""
    B, in_f = x.shape
    out_f = w2_t.shape[1]

    # --- batch tiling: TB rows per grid step (multiple of 8 sublanes) ---
    tb = min(block_rows, ((B + 7) // 8) * 8)
    b_pad = pl.cdiv(B, tb) * tb
    if b_pad != B:
        x = jnp.pad(x, ((0, b_pad - B), (0, 0)))
    grid = (b_pad // tb,)

    # Only the tiny weights/biases are lane-padded (one-time, ~130 KB);
    # streamed activations keep their true 10-wide layout in HBM.
    w1p = _pad_to(w1_t, (LANE, LANE))
    b1p = _pad_to(b1, (1, LANE))
    w2p = _pad_to(w2_t, (LANE, LANE))
    b2p = _pad_to(b2, (1, LANE))

    kernel = functools.partial(_toy_mlp_kernel, in_f=in_f)

    cost = pl.CostEstimate(
        flops=2 * b_pad * (LANE * LANE + LANE * LANE),
        transcendentals=0,
        bytes_accessed=4 * (b_pad * in_f + 2 * LANE * LANE + 2 * LANE + b_pad * LANE),
    )

    out_padded = pl.pallas_call(
        kernel,
        out_shape=jax.ShapeDtypeStruct((b_pad, LANE), x.dtype),
        grid_spec=pltpu.PrefetchScalarGridSpec(
            num_scalar_prefetch=0,
            grid=grid,
            in_specs=[
                pl.BlockSpec((tb, in_f), lambda i: (i, 0)),     # x: streamed, narrow
                pl.BlockSpec((LANE, LANE), lambda i: (0, 0)),   # w1: resident
                pl.BlockSpec((1, LANE), lambda i: (0, 0)),      # b1: resident
                pl.BlockSpec((LANE, LANE), lambda i: (0, 0)),   # w2: resident
                pl.BlockSpec((1, LANE), lambda i: (0, 0)),      # b2: resident
            ],
            out_specs=pl.BlockSpec((tb, LANE), lambda i: (i, 0)),
            scratch_shapes=[pltpu.VMEM((tb, LANE), jnp.float32)],
        ),
        compiler_params=pltpu.CompilerParams(
            dimension_semantics=("parallel",),
        ),
        cost_estimate=cost,
    )(x, w1p, b1p, w2p, b2p)

    # Slice back to the true (B, out_features) result.
    return out_padded[:B, :out_f]


def init_params(key):
    """Deterministic init mimicking nn.Linear (uniform +/- 1/sqrt(in_features))."""
    k1, k2, k3, k4 = jax.random.split(key, 4)
    in1, out1 = 10, 10
    in2, out2 = 10, 5
    lim1 = 1.0 / jnp.sqrt(jnp.float32(in1))
    lim2 = 1.0 / jnp.sqrt(jnp.float32(in2))
    # Stored directly as (in, out) — i.e. already W.T relative to PyTorch layout.
    w1_t = jax.random.uniform(k1, (in1, out1), jnp.float32, -lim1, lim1)
    b1 = jax.random.uniform(k2, (1, out1), jnp.float32, -lim1, lim1)
    w2_t = jax.random.uniform(k3, (in2, out2), jnp.float32, -lim2, lim2)
    b2 = jax.random.uniform(k4, (1, out2), jnp.float32, -lim2, lim2)
    return w1_t, b1, w2_t, b2


if __name__ == "__main__":
    key = jax.random.PRNGKey(0)
    kx, kp = jax.random.split(key)

    batch = 8
    x = jax.random.normal(kx, (batch, 10), jnp.float32)
    w1_t, b1, w2_t, b2 = init_params(kp)

    out = toy_model_forward(x, w1_t, b1, w2_t, b2)
    out = jax.block_until_ready(out)

    # Pure-JAX reference check of the same forward pass.
    ref = jnp.maximum(x @ w1_t + b1, 0.0) @ w2_t + b2
    assert out.shape == (batch, 5)
    assert jnp.allclose(out, ref, atol=1e-5, rtol=1e-5)

    # TODO(synk): DDP / torch.distributed training loop (SGD, gradients) is out
    # of scope; only ToyModel.forward is implemented here.
    print("KERNEL_OK")
</pallas_src>

<mosaic_0001>
module attributes {stable_mosaic.version = 11 : i64} {
  func.func @_toy_mlp_kernel(%arg0: i32, %arg1: memref<8x10xf32, #tpu.memory_space<vmem>>, %arg2: memref<128x128xf32, #tpu.memory_space<vmem>>, %arg3: memref<1x128xf32, #tpu.memory_space<vmem>>, %arg4: memref<128x128xf32, #tpu.memory_space<vmem>>, %arg5: memref<1x128xf32, #tpu.memory_space<vmem>>, %arg6: memref<8x128xf32, #tpu.memory_space<vmem>>, %arg7: memref<8x128xf32, #tpu.memory_space<vmem>>) attributes {dimension_semantics = [#tpu.dimension_semantics<parallel>], iteration_bounds = array<i64: 1>, scalar_prefetch = 0 : i64, scratch_operands = 1 : i64, tpu.core_type = #tpu.core_type<tc>, window_params = [{transform_indices = @transform_0, window_bounds = array<i64: 8, 10>}, {pipeline_mode = #tpu.pipeline_mode<synchronous>, transform_indices = @transform_1, window_bounds = array<i64: 128, 128>}, {pipeline_mode = #tpu.pipeline_mode<synchronous>, transform_indices = @transform_2, window_bounds = array<i64: 1, 128>}, {pipeline_mode = #tpu.pipeline_mode<synchronous>, transform_indices = @transform_3, window_bounds = array<i64: 128, 128>}, {pipeline_mode = #tpu.pipeline_mode<synchronous>, transform_indices = @transform_4, window_bounds = array<i64: 1, 128>}, {transform_indices = @transform_5, window_bounds = array<i64: 8, 128>}]} {
    %cst = arith.constant 0.000000e+00 : f32
    %0 = vector.broadcast %cst : f32 to vector<8x128xf32>
    %c0 = arith.constant 0 : index
    %c0_0 = arith.constant 0 : index
    %1 = vector.load %arg7[%c0, %c0_0] : memref<8x128xf32, #tpu.memory_space<vmem>>, vector<8x128xf32>
    tpu.vector_store %arg7[%c0, %c0_0], %0 {strides = array<i32>} : memref<8x128xf32, #tpu.memory_space<vmem>>, vector<8x128xf32>,
    %c0_1 = arith.constant 0 : index
    %c0_2 = arith.constant 0 : index
    %2 = vector.load %arg1[%c0_1, %c0_2] : memref<8x10xf32, #tpu.memory_space<vmem>>, vector<8x10xf32>
    %c0_3 = arith.constant 0 : index
    %c0_4 = arith.constant 0 : index
    %3 = vector.load %arg7[%c0_3, %c0_4] : memref<8x128xf32, #tpu.memory_space<vmem>>, vector<8x10xf32>
    tpu.vector_store %arg7[%c0_3, %c0_4], %2 {strides = array<i32>} : memref<8x128xf32, #tpu.memory_space<vmem>>, vector<8x10xf32>,
    %c0_5 = arith.constant 0 : index
    %c0_6 = arith.constant 0 : index
    %4 = vector.load %arg7[%c0_5, %c0_6] : memref<8x128xf32, #tpu.memory_space<vmem>>, vector<8x128xf32>
    %c0_7 = arith.constant 0 : index
    %c0_8 = arith.constant 0 : index
    %5 = vector.load %arg2[%c0_7, %c0_8] : memref<128x128xf32, #tpu.memory_space<vmem>>, vector<128x128xf32>
    %cst_9 = arith.constant dense<0.000000e+00> : vector<8x128xf32>
    %6 = tpu.matmul %4, %5, %cst_9 {dimension_numbers = #tpu.dot_dimension_numbers<[1], [0], [0], [1], [0, 0, 1, 1], [], []>} : vector<8x128xf32>, vector<128x128xf32>, vector<8x128xf32> -> vector<8x128xf32>
    %c0_10 = arith.constant 0 : index
    %c0_11 = arith.constant 0 : index
    %7 = vector.load %arg3[%c0_10, %c0_11] : memref<1x128xf32, #tpu.memory_space<vmem>>, vector<1x128xf32>
    %8 = vector.broadcast %7 : vector<1x128xf32> to vector<8x128xf32>
    %9 = arith.addf %6, %8 : vector<8x128xf32>
    %cst_12 = arith.constant 0.000000e+00 : f32
    %10 = vector.broadcast %cst_12 : f32 to vector<8x128xf32>
    %11 = arith.maximumf %9, %10 : vector<8x128xf32>
    %c0_13 = arith.constant 0 : index
    %c0_14 = arith.constant 0 : index
    %12 = vector.load %arg4[%c0_13, %c0_14] : memref<128x128xf32, #tpu.memory_space<vmem>>, vector<128x128xf32>
    %cst_15 = arith.constant dense<0.000000e+00> : vector<8x128xf32>
    %13 = tpu.matmul %11, %12, %cst_15 {dimension_numbers = #tpu.dot_dimension_numbers<[1], [0], [0], [1], [0, 0, 1, 1], [], []>} : vector<8x128xf32>, vector<128x128xf32>, vector<8x128xf32> -> vector<8x128xf32>
    %c0_16 = arith.constant 0 : index
    %c0_17 = arith.constant 0 : index
    %14 = vector.load %arg5[%c0_16, %c0_17] : memref<1x128xf32, #tpu.memory_space<vmem>>, vector<1x128xf32>
    %15 = vector.broadcast %14 : vector<1x128xf32> to vector<8x128xf32>
    %16 = arith.addf %13, %15 : vector<8x128xf32>
    %c0_18 = arith.constant 0 : index
    %c0_19 = arith.constant 0 : index
    %17 = vector.load %arg6[%c0_18, %c0_19] : memref<8x128xf32, #tpu.memory_space<vmem>>, vector<8x128xf32>
    tpu.vector_store %arg6[%c0_18, %c0_19], %16 {strides = array<i32>} : memref<8x128xf32, #tpu.memory_space<vmem>>, vector<8x128xf32>,
    return
  }
  func.func @transform_0(%arg0: i32) -> (i32, i32) {
    %c0_i32 = arith.constant 0 : i32
    %c0_i32_0 = arith.constant 0 : i32
    return %arg0, %c0_i32 : i32, i32
  }
  func.func @transform_1(%arg0: i32) -> (i32, i32) {
    %c0_i32 = arith.constant 0 : i32
    %c0_i32_0 = arith.constant 0 : i32
    %c0_i32_1 = arith.constant 0 : i32
    return %c0_i32, %c0_i32_0 : i32, i32
  }
  func.func @transform_2(%arg0: i32) -> (i32, i32) {
    %c0_i32 = arith.constant 0 : i32
    %c0_i32_0 = arith.constant 0 : i32
    %c0_i32_1 = arith.constant 0 : i32
    return %c0_i32, %c0_i32_0 : i32, i32
  }
  func.func @transform_3(%arg0: i32) -> (i32, i32) {
    %c0_i32 = arith.constant 0 : i32
    %c0_i32_0 = arith.constant 0 : i32
    %c0_i32_1 = arith.constant 0 : i32
    return %c0_i32, %c0_i32_0 : i32, i32
  }
  func.func @transform_4(%arg0: i32) -> (i32, i32) {
    %c0_i32 = arith.constant 0 : i32
    %c0_i32_0 = arith.constant 0 : i32
    %c0_i32_1 = arith.constant 0 : i32
    return %c0_i32, %c0_i32_0 : i32, i32
  }
  func.func @transform_5(%arg0: i32) -> (i32, i32) {
    %c0_i32 = arith.constant 0 : i32
    %c0_i32_0 = arith.constant 0 : i32
    return %arg0, %c0_i32 : i32, i32
  }
}

</mosaic_0001>

<llo_original>
// kernel: tpu_custom_call.1
$region0: #{tpu_custom_call.1}
  #allocation0 [shape = 'u32[]', space=smem, size = 0x4, offset = 0x4, fixed_abs, tag = 'smem constant byte address 0x4 - core index']
  #allocation1 [shape = 'u32[144,128]{1,0:T(1,128)}', space=vmem, size = 0x12000, scoped, tag = 'internal scratch']
  #allocation2 [shape = 'f32[8,128]{1,0:T(8,128)}', space=vmem, size = 0x1000, scoped, tag = 'scratch operand']
  %s0 = inlined_call_operand.hbm [shape: f32[8,10], index: 0, kind: input, shape index: {}]
  %s1 = inlined_call_operand.hbm [shape: f32[128,128], index: 1, kind: input, shape index: {}]
  %s2 = inlined_call_operand.vmem [shape: f32[1,128], index: 2, kind: input, shape index: {}]
  %s3 = inlined_call_operand.hbm [shape: f32[128,128], index: 3, kind: input, shape index: {}]
  %s4 = inlined_call_operand.vmem [shape: f32[1,128], index: 4, kind: input, shape index: {}]
  %s5 = inlined_call_operand.hbm [shape: f32[8,128], index: 5, kind: output, shape index: {}]
  %s6 = sld [smem:[#allocation0]]
  $region42: #{tpu_custom_call.1} parent=0
    _
  %s8 = ssub.s32 1, %s6
  %s9 = scalar_select 0, %s8, %s6
  $region1: #{tpu_custom_call.1} parent=0
    #allocation3 [shape = 'u8[4096]{0}', space=vmem, size = 0x1000, scoped, tag = 'input window, operand 0, single buffered']
    #allocation4 [shape = 's32[1]{0}', space=sflag, size = 0x4, scoped, tag = 'scoped memory for tpu_custom_call.1']
    #allocation5 [shape = 's32[1]{0}', space=sflag, size = 0x4, scoped, tag = 'scoped memory for tpu_custom_call.1']
    #allocation6 [shape = 'u8[65536]{0}', space=vmem, size = 0x10000, scoped, tag = 'input window, operand 1, single buffered']
    #allocation7 [shape = 's32[1]{0}', space=sflag, size = 0x4, scoped, tag = 'scoped memory for tpu_custom_call.1']
    #allocation8 [shape = 'u8[65536]{0}', space=vmem, size = 0x10000, scoped, tag = 'input window, operand 3, single buffered']
    #allocation9 [shape = 'u8[4096]{0}', space=vmem, size = 0x1000, scoped, tag = 'output window, operand 0, single buffered']
    %10 = vsyncpa [#allocation4], 0
    %11 = vsyncpa [#allocation7], 0
    %12 = vsyncpa [#allocation5], 0
    // Predicated region
    $region2: #{tpu_custom_call.1} parent=1 // pred_check
      _
    $region3: #{tpu_custom_call.1} parent=1 // pred_check_branch
      %14 = sbr.rel (0) target = $region5
    $region4: #{tpu_custom_call.1} parent=1 // pred_region
      %s16 = ssub.s32 128, 128
      %17 = vsyncadd [#allocation4], %s16
      %s19 = sshll.u32 [#allocation3], 4
      %s20 = int_to_ptr.vmem [resolvable:$true] %s19
      %22 = dma.hbm_to_vmem [thread:$0]  %s0, 128, %s20, [#allocation4]
    $region5: #{tpu_custom_call.1} parent=1 // pred_fallthru
      _
    // Predicated region
    $region6: #{tpu_custom_call.1} parent=1 // pred_check
      _
    $region7: #{tpu_custom_call.1} parent=1 // pred_check_branch
      %24 = sbr.rel (0) target = $region9
    $region8: #{tpu_custom_call.1} parent=1 // pred_region
      %s26 = ssub.s32 2048, 2048
      %27 = vsyncadd [#allocation7], %s26
      %s28 = sshll.u32 [#allocation6], 4
      %s29 = int_to_ptr.vmem [resolvable:$true] %s28
      %34 = dma.hbm_to_vmem [thread:$0]  %s1, 2048, %s29, [#allocation7], 128, 128, 8
    $region9: #{tpu_custom_call.1} parent=1 // pred_fallthru
      _
    // Predicated region
    $region10: #{tpu_custom_call.1} parent=1 // pred_check
      _
    $region11: #{tpu_custom_call.1} parent=1 // pred_check_branch
      %36 = sbr.rel (0) target = $region13
    $region12: #{tpu_custom_call.1} parent=1 // pred_region
      _
    $region13: #{tpu_custom_call.1} parent=1 // pred_fallthru
      _
    // Predicated region
    $region14: #{tpu_custom_call.1} parent=1 // pred_check
      _
    $region15: #{tpu_custom_call.1} parent=1 // pred_check_branch
      %38 = sbr.rel (0) target = $region17
    $region16: #{tpu_custom_call.1} parent=1 // pred_region
      %s40 = ssub.s32 2048, 2048
      %41 = vsyncadd [#allocation7], %s40
      %s42 = sshll.u32 [#allocation8], 4
      %s43 = int_to_ptr.vmem [resolvable:$true] %s42
      %48 = dma.hbm_to_vmem [thread:$0]  %s3, 2048, %s43, [#allocation7], 128, 128, 8
    $region17: #{tpu_custom_call.1} parent=1 // pred_fallthru
      _
    // Predicated region
    $region18: #{tpu_custom_call.1} parent=1 // pred_check
      _
    $region19: #{tpu_custom_call.1} parent=1 // pred_check_branch
      %50 = sbr.rel (0) target = $region21
    $region20: #{tpu_custom_call.1} parent=1 // pred_region
      _
    $region21: #{tpu_custom_call.1} parent=1 // pred_fallthru
      _
    // Predicated region
    $region22: #{tpu_custom_call.1} parent=1 // pred_check
      _
    $region23: #{tpu_custom_call.1} parent=1 // pred_check_branch
      %52 = sbr.rel (0) target = $region25
    $region24: #{tpu_custom_call.1} parent=1 // pred_region
      %53 = dma.done [#allocation4], 128
    $region25: #{tpu_custom_call.1} parent=1 // pred_fallthru
      _
    // Predicated region
    $region26: #{tpu_custom_call.1} parent=1 // pred_check
      _
    $region27: #{tpu_custom_call.1} parent=1 // pred_check_branch
      %55 = sbr.rel (0) target = $region29
    $region28: #{tpu_custom_call.1} parent=1 // pred_region
      %56 = dma.done [#allocation7], 2048
    $region29: #{tpu_custom_call.1} parent=1 // pred_fallthru
      _
    // Predicated region
    $region30: #{tpu_custom_call.1} parent=1 // pred_check
      _
    $region31: #{tpu_custom_call.1} parent=1 // pred_check_branch
      %58 = sbr.rel (0) target = $region33
    $region32: #{tpu_custom_call.1} parent=1 // pred_region
      %59 = dma.done [#allocation7], 2048
    $region33: #{tpu_custom_call.1} parent=1 // pred_fallthru
      _
    %60 = vst [vmem:[#allocation2] sm:$0xff] 0.0
    %v61 = vld [vmem:[#allocation3] sm:$0xff]
    %vm62 = vcmask 80896
    %63 = vst.msk [vmem:[#allocation2] sm:$0xff] %vm62, %v61
    %v64 = vld [vmem:[#allocation2] sm:$0xff]
    %v65 = vld [vmem:[#allocation6] sm:$0xff]
    %v66 = vld [vmem:[#allocation6 + $0x8] sm:$0xff]
    %v67 = vld [vmem:[#allocation6 + $0x10] sm:$0xff]
    %v68 = vld [vmem:[#allocation6 + $0x18] sm:$0xff]
    %v69 = vld [vmem:[#allocation6 + $0x20] sm:$0xff]
    %v70 = vld [vmem:[#allocation6 + $0x28] sm:$0xff]
    %v71 = vld [vmem:[#allocation6 + $0x30] sm:$0xff]
    %v72 = vld [vmem:[#allocation6 + $0x38] sm:$0xff]
    %v73 = vld [vmem:[#allocation6 + $0x40] sm:$0xff]
    %v74 = vld [vmem:[#allocation6 + $0x48] sm:$0xff]
    %v75 = vld [vmem:[#allocation6 + $0x50] sm:$0xff]
    %v76 = vld [vmem:[#allocation6 + $0x58] sm:$0xff]
    %v77 = vld [vmem:[#allocation6 + $0x60] sm:$0xff]
    %v78 = vld [vmem:[#allocation6 + $0x68] sm:$0xff]
    %v79 = vld [vmem:[#allocation6 + $0x70] sm:$0xff]
    %v80 = vld [vmem:[#allocation6 + $0x78] sm:$0xff]
    %v81 = vld [vmem:[%s2] sm:$0x1]
    %v83 = vlaneseq
    %v84 = vshrl.u32 %v83, 7
    %v85 = vsub.s32 0, %v84
    %v86 = vrot.slane %v81, %v85
    %88 = vmatprep.subr.mxu0 0.0
    %89 = vmatpush1.msra.mxu0 %v80
    %90 = vmatprep.subr.mxu0 0.0
    %91 = vmatpush1.msra.mxu0 %v79
    %92 = vmatprep.subr.mxu0 0.0
    %93 = vmatpush1.msra.mxu0 %v78
    %94 = vmatprep.subr.mxu0 0.0
    %95 = vmatpush1.msra.mxu0 %v77
    %96 = vmatprep.subr.mxu0 0.0
    %97 = vmatpush1.msra.mxu0 %v76
    %98 = vmatprep.subr.mxu0 0.0
    %99 = vmatpush1.msra.mxu0 %v75
    %100 = vmatprep.subr.mxu0 0.0
    %101 = vmatpush1.msra.mxu0 %v74
    %102 = vmatprep.subr.mxu0 0.0
    %103 = vmatpush1.msra.mxu0 %v73
    %104 = vmatprep.subr.mxu0 0.0
    %105 = vmatpush1.msra.mxu0 %v72
    %106 = vmatprep.subr.mxu0 0.0
    %107 = vmatpush1.msra.mxu0 %v71
    %108 = vmatprep.subr.mxu0 0.0
    %109 = vmatpush1.msra.mxu0 %v70
    %110 = vmatprep.subr.mxu0 0.0
    %111 = vmatpush1.msra.mxu0 %v69
    %112 = vmatprep.subr.mxu0 0.0
    %113 = vmatpush1.msra.mxu0 %v68
    %114 = vmatprep.subr.mxu0 0.0
    %115 = vmatpush1.msra.mxu0 %v67
    %116 = vmatprep.subr.mxu0 0.0
    %117 = vmatpush1.msra.mxu0 %v66
    %118 = vmatprep.subr.mxu0 0.0
    %119 = vmatpush1.msra.mxu0 %v65
    %120 = vmatprep.subr.mxu0 0.0
    %121 = vmatpush2.msra.mxu0 0.0
    %122 = vmatprep.subr.mxu0 0.0
    %123 = vmatpush2.msra.mxu0 0.0
    %124 = vmatprep.subr.mxu0 0.0
    %125 = vmatpush2.msra.mxu0 0.0
    %126 = vmatprep.subr.mxu0 0.0
    %127 = vmatpush2.msra.mxu0 0.0
    %128 = vmatprep.subr.mxu0 0.0
    %129 = vmatpush2.msra.mxu0 0.0
    %130 = vmatprep.subr.mxu0 0.0
    %131 = vmatpush2.msra.mxu0 0.0
    %132 = vmatprep.subr.mxu0 0.0
    %133 = vmatpush2.msra.mxu0 0.0
    %134 = vmatprep.subr.mxu0 0.0
    %135 = vmatpush2.msra.mxu0 0.0
    %136 = vmatprep.subr.mxu0 0.0
    %137 = vmatpush2.msra.mxu0 0.0
    %138 = vmatprep.subr.mxu0 0.0
    %139 = vmatpush2.msra.mxu0 0.0
    %140 = vmatprep.subr.mxu0 0.0
    %141 = vmatpush2.msra.mxu0 0.0
    %142 = vmatprep.subr.mxu0 0.0
    %143 = vmatpush2.msra.mxu0 0.0
    %144 = vmatprep.subr.mxu0 0.0
    %145 = vmatpush2.msra.mxu0 0.0
    %146 = vmatprep.subr.mxu0 0.0
    %147 = vmatpush2.msra.mxu0 0.0
    %148 = vmatprep.subr.mxu0 0.0
    %149 = vmatpush2.msra.mxu0 0.0
    %150 = vmatprep.subr.mxu0 0.0
    %151 = vmatpush2.msra.mxu0 0.0
    %152 = vmatprep.mubr.f32.mxu0 0.0
    %153 = vmatmul.mubr.f32.gmra.mxu0 %v64
    %v154 = vpop.f32.mrf.mxu0
    %v155 = vadd.f32 %v86, %v154
    %v156 = vpop.f32.mrf.mxu0
    %157 = vdwg.mxu0
    %v158 = vmax.f32 %v155, 0.0
    %v159 = vld [vmem:[#allocation8] sm:$0xff]
    %v160 = vld [vmem:[#allocation8 + $0x8] sm:$0xff]
    %v161 = vld [vmem:[#allocation8 + $0x10] sm:$0xff]
    %v162 = vld [vmem:[#allocation8 + $0x18] sm:$0xff]
    %v163 = vld [vmem:[#allocation8 + $0x20] sm:$0xff]
    %v164 = vld [vmem:[#allocation8 + $0x28] sm:$0xff]
    %v165 = vld [vmem:[#allocation8 + $0x30] sm:$0xff]
    %v166 = vld [vmem:[#allocation8 + $0x38] sm:$0xff]
    %v167 = vld [vmem:[#allocation8 + $0x40] sm:$0xff]
    %v168 = vld [vmem:[#allocation8 + $0x48] sm:$0xff]
    %v169 = vld [vmem:[#allocation8 + $0x50] sm:$0xff]
    %v170 = vld [vmem:[#allocation8 + $0x58] sm:$0xff]
    %v171 = vld [vmem:[#allocation8 + $0x60] sm:$0xff]
    %v172 = vld [vmem:[#allocation8 + $0x68] sm:$0xff]
    %v173 = vld [vmem:[#allocation8 + $0x70] sm:$0xff]
    %v174 = vld [vmem:[#allocation8 + $0x78] sm:$0xff]
    %v175 = vld [vmem:[%s4] sm:$0x1]
    %v177 = vlaneseq
    %v178 = vshrl.u32 %v177, 7
    %v179 = vsub.s32 0, %v178
    %v180 = vrot.slane %v175, %v179
    %182 = vmatprep.subr.mxu0 0.0
    %183 = vmatpush1.msra.mxu0 %v174
    %184 = vmatprep.subr.mxu0 0.0
    %185 = vmatpush1.msra.mxu0 %v173
    %186 = vmatprep.subr.mxu0 0.0
    %187 = vmatpush1.msra.mxu0 %v172
    %188 = vmatprep.subr.mxu0 0.0
    %189 = vmatpush1.msra.mxu0 %v171
    %190 = vmatprep.subr.mxu0 0.0
    %191 = vmatpush1.msra.mxu0 %v170
    %192 = vmatprep.subr.mxu0 0.0
    %193 = vmatpush1.msra.mxu0 %v169
    %194 = vmatprep.subr.mxu0 0.0
    %195 = vmatpush1.msra.mxu0 %v168
    %196 = vmatprep.subr.mxu0 0.0
    %197 = vmatpush1.msra.mxu0 %v167
    %198 = vmatprep.subr.mxu0 0.0
    %199 = vmatpush1.msra.mxu0 %v166
    %200 = vmatprep.subr.mxu0 0.0
    %201 = vmatpush1.msra.mxu0 %v165
    %202 = vmatprep.subr.mxu0 0.0
    %203 = vmatpush1.msra.mxu0 %v164
    %204 = vmatprep.subr.mxu0 0.0
    %205 = vmatpush1.msra.mxu0 %v163
    %206 = vmatprep.subr.mxu0 0.0
    %207 = vmatpush1.msra.mxu0 %v162
    %208 = vmatprep.subr.mxu0 0.0
    %209 = vmatpush1.msra.mxu0 %v161
    %210 = vmatprep.subr.mxu0 0.0
    %211 = vmatpush1.msra.mxu0 %v160
    %212 = vmatprep.subr.mxu0 0.0
    %213 = vmatpush1.msra.mxu0 %v159
    %214 = vmatprep.subr.mxu0 0.0
    %215 = vmatpush2.msra.mxu0 0.0
    %216 = vmatprep.subr.mxu0 0.0
    %217 = vmatpush2.msra.mxu0 0.0
    %218 = vmatprep.subr.mxu0 0.0
    %219 = vmatpush2.msra.mxu0 0.0
    %220 = vmatprep.subr.mxu0 0.0
    %221 = vmatpush2.msra.mxu0 0.0
    %222 = vmatprep.subr.mxu0 0.0
    %223 = vmatpush2.msra.mxu0 0.0
    %224 = vmatprep.subr.mxu0 0.0
    %225 = vmatpush2.msra.mxu0 0.0
    %226 = vmatprep.subr.mxu0 0.0
    %227 = vmatpush2.msra.mxu0 0.0
    %228 = vmatprep.subr.mxu0 0.0
    %229 = vmatpush2.msra.mxu0 0.0
    %230 = vmatprep.subr.mxu0 0.0
    %231 = vmatpush2.msra.mxu0 0.0
    %232 = vmatprep.subr.mxu0 0.0
    %233 = vmatpush2.msra.mxu0 0.0
    %234 = vmatprep.subr.mxu0 0.0
    %235 = vmatpush2.msra.mxu0 0.0
    %236 = vmatprep.subr.mxu0 0.0
    %237 = vmatpush2.msra.mxu0 0.0
    %238 = vmatprep.subr.mxu0 0.0
    %239 = vmatpush2.msra.mxu0 0.0
    %240 = vmatprep.subr.mxu0 0.0
    %241 = vmatpush2.msra.mxu0 0.0
    %242 = vmatprep.subr.mxu0 0.0
    %243 = vmatpush2.msra.mxu0 0.0
    %244 = vmatprep.subr.mxu0 0.0
    %245 = vmatpush2.msra.mxu0 0.0
    %246 = vmatprep.mubr.f32.mxu0 0.0
    %247 = vmatmul.mubr.f32.gmra.mxu0 %v158
    %v248 = vpop.f32.mrf.mxu0
    %v249 = vadd.f32 %v180, %v248
    %v250 = vpop.f32.mrf.mxu0
    %251 = vdwg.mxu0
    %252 = vst [vmem:[#allocation9] sm:$0xff] %v249
    // Predicated region
    $region34: #{tpu_custom_call.1} parent=1 // pred_check
      _
    $region35: #{tpu_custom_call.1} parent=1 // pred_check_branch
      %254 = sbr.rel (0) target = $region37
    $region36: #{tpu_custom_call.1} parent=1 // pred_region
      %s256 = ssub.s32 128, 128
      %257 = vsyncadd [#allocation5], %s256
      %s259 = sshll.u32 [#allocation9], 4
      %s260 = int_to_ptr.vmem [resolvable:$true] %s259
      %262 = dma.vmem_to_hbm [thread:$0]  %s260, 128, %s5, [#allocation5]
    $region37: #{tpu_custom_call.1} parent=1 // pred_fallthru
      _
    // Predicated region
    $region38: #{tpu_custom_call.1} parent=1 // pred_check
      _
    $region39: #{tpu_custom_call.1} parent=1 // pred_check_branch
      %264 = sbr.rel (0) target = $region41
    $region40: #{tpu_custom_call.1} parent=1 // pred_region
      %265 = dma.done [#allocation5], 128
    $region41: #{tpu_custom_call.1} parent=1 // pred_fallthru
      _
    %266 = vsyncpa [#allocation4], 1
    %267 = vsyncpa [#allocation7], 1
    %268 = vsyncpa [#allocation5], 1

</llo_original>
